<compile_context>
chip_gen: v7x
topology: tpu7x:2x2x1
jax: 0.10.0
libtpu: 0.0.40
codegen_flags: <defaults>
</compile_context>

<pallas_src>
import functools

import jax
import jax.numpy as jnp
from jax.experimental import pallas as pl
from jax.experimental.pallas import tpu as pltpu


def _round_up(x, m):
    return (x + m - 1) // m * m


# ----------------------------------------------------------------------------
# Kernel 1: tiled symmetric weight-scale reduction
#   scale = clamp(max|w|, 1e-8) / n        (also emits 1/scale)
# ----------------------------------------------------------------------------
def _scale_kernel(w_ref, scale_ref, inv_scale_ref, absmax_ref, *, n, V, RB):
    i = pl.program_id(0)

    @pl.when(i == 0)
    def _():
        absmax_ref[0] = 0.0

    w = w_ref[...]                                         # (RB, D) f32 tile
    # Mask rows past the true vocab size (boundary block holds garbage there).
    row = i * RB + jax.lax.broadcasted_iota(jnp.int32, w.shape, 0)
    w = jnp.where(row < V, w, 0.0)
    blk_max = jnp.max(jnp.abs(w))                          # one abs + one reduce
    absmax_ref[0] = jnp.maximum(absmax_ref[0], blk_max)

    @pl.when(i == pl.num_programs(0) - 1)
    def _():
        s = jnp.maximum(absmax_ref[0], 1e-8) / n
        scale_ref[0] = s
        inv_scale_ref[0] = 1.0 / s


def compute_weight_scaling_factor(weight, weight_bit=8, rows_per_block=512):
    V, D = weight.shape
    n = float(2 ** (weight_bit - 1) - 1)
    RB = V if V <= rows_per_block else rows_per_block      # RB=512 -> 256 KiB/block f32
    grid = pl.cdiv(V, RB)
    kernel = functools.partial(_scale_kernel, n=n, V=V, RB=RB)
    scale, inv_scale = pl.pallas_call(
        kernel,
        out_shape=(jax.ShapeDtypeStruct((1,), jnp.float32),
                   jax.ShapeDtypeStruct((1,), jnp.float32)),
        grid_spec=pltpu.PrefetchScalarGridSpec(
            num_scalar_prefetch=0,
            grid=(grid,),
            in_specs=[pl.BlockSpec((RB, D), lambda i: (i, 0))],
            out_specs=(pl.BlockSpec(memory_space=pltpu.MemorySpace.SMEM),
                       pl.BlockSpec(memory_space=pltpu.MemorySpace.SMEM)),
            scratch_shapes=[pltpu.SMEM((1,), jnp.float32)],
        ),
        compiler_params=pltpu.CompilerParams(
            dimension_semantics=("arbitrary",),            # running-max reduction
        ),
    )(weight)
    return scale, inv_scale


# ----------------------------------------------------------------------------
# Kernel 2: token-blocked embedding gather + symmetric quantization.
# Weight stays in HBM; per grid step TB per-row DMAs land in a (TB, D) VMEM
# scratch, then the whole tile is quantized and stored as int8.
# ----------------------------------------------------------------------------
def _gather_quant_kernel(idx_ref, inv_scale_ref, w_hbm, out_ref,
                         rows_vmem, sems, *, n, tb, quantize):
    i = pl.program_id(0)
    base = i * tb

    # Issue all TB row fetches (concurrent DMAs; indices come from SMEM).
    # NOTE: indices are assumed in-range [0, V), matching PyTorch UB otherwise.
    for t in range(tb):
        row_id = idx_ref[base + t]
        pltpu.make_async_copy(
            w_hbm.at[pl.ds(row_id, 1), :],
            rows_vmem.at[pl.ds(t, 1), :],
            sems.at[t],
        ).start()

    # Wait for all fetches of this block.
    for t in range(tb):
        pltpu.make_async_copy(
            w_hbm.at[pl.ds(0, 1), :],
            rows_vmem.at[pl.ds(t, 1), :],
            sems.at[t],
        ).wait()

    rows = rows_vmem[...]                                  # (TB, D) f32
    if quantize:
        q = jnp.round(rows * inv_scale_ref[0])             # round-half-to-even
        q = jnp.clip(q, -n, n - 1.0)
        out_ref[...] = q.astype(out_ref.dtype)             # direct int8 store
    else:
        out_ref[...] = rows.astype(out_ref.dtype)


def _gather(idx_pad, inv_scale, weight, *, T, n, tb, quantize, out_dtype):
    V, D = weight.shape
    grid = idx_pad.shape[0] // tb
    kernel = functools.partial(_gather_quant_kernel, n=float(n), tb=tb,
                               quantize=quantize)
    return pl.pallas_call(
        kernel,
        out_shape=jax.ShapeDtypeStruct((T, D), out_dtype),
        grid_spec=pltpu.PrefetchScalarGridSpec(
            num_scalar_prefetch=1,                          # idx -> SMEM
            grid=(grid,),
            in_specs=[
                pl.BlockSpec(memory_space=pltpu.MemorySpace.SMEM),  # inv_scale (1,)
                pl.BlockSpec(memory_space=pl.ANY),                  # weight in HBM
            ],
            out_specs=pl.BlockSpec((tb, D), lambda i, idx_ref: (i, 0)),
            scratch_shapes=[
                pltpu.VMEM((tb, D), weight.dtype),
                pltpu.SemaphoreType.DMA((tb,)),
            ],
        ),
        compiler_params=pltpu.CompilerParams(
            dimension_semantics=("parallel",),              # independent token blocks
        ),
    )(idx_pad, inv_scale, weight)


# ----------------------------------------------------------------------------
# Module-level forward wrapper (mirrors QuantEmbedding.forward)
# TODO(synk): padding_idx / max_norm / scale_grad_by_freq / sparse options are
#             not implemented (they are the inert defaults in this module).
# ----------------------------------------------------------------------------
def quant_embedding_forward(x, weight, weight_bit=8, quant_mode=True,
                            tokens_per_block=32):
    B, S = x.shape
    V, D = weight.shape
    T = B * S
    TB = tokens_per_block
    idx = x.reshape(-1).astype(jnp.int32)
    T_pad = _round_up(max(T, TB), TB)
    idx_pad = jnp.pad(idx, (0, T_pad - T))                 # pad with valid row 0
    n = 2 ** (weight_bit - 1) - 1

    if not quant_mode:
        dummy_inv = jnp.zeros((1,), jnp.float32)           # unused in this branch
        emb = _gather(idx_pad, dummy_inv, weight, T=T, n=n, tb=TB,
                      quantize=False, out_dtype=weight.dtype)
        return emb.reshape(B, S, D), None

    scale, inv_scale = compute_weight_scaling_factor(weight, weight_bit)
    emb_int8 = _gather(idx_pad, inv_scale, weight, T=T, n=n, tb=TB,
                       quantize=True, out_dtype=jnp.int8)
    return emb_int8.reshape(B, S, D), scale


# ----------------------------------------------------------------------------
# Pure-JAX reference for verification
# ----------------------------------------------------------------------------
def _ref_forward(x, weight, weight_bit=8):
    n = 2 ** (weight_bit - 1) - 1
    absmax = jnp.maximum(jnp.abs(weight.min()), jnp.abs(weight.max()))
    scale = jnp.maximum(absmax, 1e-8) / n
    w_int = jnp.clip(jnp.round(weight * (1.0 / scale)), -n, n - 1).astype(jnp.int8)
    return w_int[x], scale.reshape(1)


if __name__ == "__main__":
    # Small synthetic config: vocab=600 (exercises the tiled/masked absmax),
    # hidden=128, batch=2, seq=24 (T=48 -> two token blocks, last one partial).
    V, D = 600, 128
    B, S = 2, 24
    weight_bit = 8

    key = jax.random.PRNGKey(0)
    kw, kx = jax.random.split(key)
    weight = jax.random.normal(kw, (V, D), dtype=jnp.float32)
    x = jax.random.randint(kx, (B, S), 0, V, dtype=jnp.int32)

    emb_int, scale = quant_embedding_forward(x, weight, weight_bit=weight_bit,
                                             quant_mode=True)
    emb_int = jax.block_until_ready(emb_int)
    scale = jax.block_until_ready(scale)

    ref_emb, ref_scale = _ref_forward(x, weight, weight_bit)

    assert emb_int.shape == (B, S, D) and emb_int.dtype == jnp.int8
    assert scale.shape == (1,) and scale.dtype == jnp.float32
    assert jnp.array_equal(emb_int, ref_emb)
    assert jnp.allclose(scale, ref_scale, rtol=1e-6, atol=0.0)

    # Non-quant branch sanity check (plain embedding gather).
    emb_fp, none_scale = quant_embedding_forward(x, weight, quant_mode=False)
    emb_fp = jax.block_until_ready(emb_fp)
    assert none_scale is None
    assert jnp.allclose(emb_fp, weight[x])

    print("KERNEL_OK")
</pallas_src>

<mosaic_0001>
module attributes {stable_mosaic.version = 11 : i64} {
  func.func @_scale_kernel(%arg0: i32, %arg1: memref<512x128xf32, #tpu.memory_space<vmem>>, %arg2: memref<1xf32, #tpu.memory_space<smem>>, %arg3: memref<1xf32, #tpu.memory_space<smem>>, %arg4: memref<1xf32, #tpu.memory_space<smem>>) attributes {dimension_semantics = [#tpu.dimension_semantics<arbitrary>], iteration_bounds = array<i64: 2>, scalar_prefetch = 0 : i64, scratch_operands = 1 : i64, tpu.core_type = #tpu.core_type<tc>, window_params = [{transform_indices = @transform_0, window_bounds = array<i64: 512, 128>}, {transform_indices = @transform_1, window_bounds = array<i64: 1>}, {transform_indices = @transform_2, window_bounds = array<i64: 1>}]} {
    %c0_i32 = arith.constant 0 : i32
    %0 = arith.cmpi eq, %arg0, %c0_i32 : i32
    %1 = arith.extui %0 : i1 to i32
    %c0_i32_0 = arith.constant 0 : i32
    %2 = arith.cmpi ne, %1, %c0_i32_0 : i32
    scf.if %2 {
      %cst_6 = arith.constant 0.000000e+00 : f32
      %c0_7 = arith.constant 0 : index
      %23 = memref.load %arg4[%c0_7] : memref<1xf32, #tpu.memory_space<smem>>
      memref.store %cst_6, %arg4[%c0_7] : memref<1xf32, #tpu.memory_space<smem>>
    } else {
    }
    %c0 = arith.constant 0 : index
    %c0_1 = arith.constant 0 : index
    %3 = vector.load %arg1[%c0, %c0_1] : memref<512x128xf32, #tpu.memory_space<vmem>>, vector<512x128xf32>
    %c512_i32 = arith.constant 512 : i32
    %4 = arith.muli %arg0, %c512_i32 : i32
    %5 = tpu.iota {dimensions = array<i32: 0>} : vector<512x128xi32>
    %6 = vector.broadcast %4 : i32 to vector<512x128xi32>
    %7 = arith.addi %6, %5 : vector<512x128xi32>
    %c600_i32 = arith.constant 600 : i32
    %8 = vector.broadcast %c600_i32 : i32 to vector<512x128xi32>
    %9 = arith.cmpi slt, %7, %8 : vector<512x128xi32>
    %cst = arith.constant 0.000000e+00 : f32
    %10 = vector.broadcast %cst : f32 to vector<512x128xf32>
    %11 = arith.select %9, %3, %10 : vector<512x128xi1>, vector<512x128xf32>
    %12 = math.absf %11 : vector<512x128xf32>
    %13 = vector.shape_cast %12 : vector<512x128xf32> to vector<1x512x128xf32>
    %cst_2 = arith.constant dense<0xFF800000> : vector<1xf32>
    %14 = vector.multi_reduction <maximumf>, %13, %cst_2 [1, 2] : vector<1x512x128xf32> to vector<1xf32>
    %15 = vector.shape_cast %14 : vector<1xf32> to vector<1x1x1xf32>
    %16 = vector.extract %15[0, 0, 0] : f32 from vector<1x1x1xf32>
    %c0_3 = arith.constant 0 : index
    %17 = memref.load %arg4[%c0_3] : memref<1xf32, #tpu.memory_space<smem>>
    %18 = arith.maximumf %17, %16 : f32
    %c0_4 = arith.constant 0 : index
    %19 = memref.load %arg4[%c0_4] : memref<1xf32, #tpu.memory_space<smem>>
    memref.store %18, %arg4[%c0_4] : memref<1xf32, #tpu.memory_space<smem>>
    %c1_i32 = arith.constant 1 : i32
    %20 = arith.cmpi eq, %arg0, %c1_i32 : i32
    %21 = arith.extui %20 : i1 to i32
    %c0_i32_5 = arith.constant 0 : i32
    %22 = arith.cmpi ne, %21, %c0_i32_5 : i32
    scf.if %22 {
      %c0_6 = arith.constant 0 : index
      %23 = memref.load %arg4[%c0_6] : memref<1xf32, #tpu.memory_space<smem>>
      %cst_7 = arith.constant 9.99999993E-9 : f32
      %24 = arith.maximumf %23, %cst_7 : f32
      %cst_8 = arith.constant 1.270000e+02 : f32
      %25 = arith.divf %24, %cst_8 : f32
      %c0_9 = arith.constant 0 : index
      %26 = memref.load %arg2[%c0_9] : memref<1xf32, #tpu.memory_space<smem>>
      memref.store %25, %arg2[%c0_9] : memref<1xf32, #tpu.memory_space<smem>>
      %cst_10 = arith.constant 1.000000e+00 : f32
      %27 = arith.divf %cst_10, %25 : f32
      %c0_11 = arith.constant 0 : index
      %28 = memref.load %arg3[%c0_11] : memref<1xf32, #tpu.memory_space<smem>>
      memref.store %27, %arg3[%c0_11] : memref<1xf32, #tpu.memory_space<smem>>
    } else {
    }
    return
  }
  func.func @transform_0(%arg0: i32) -> (i32, i32) {
    %c0_i32 = arith.constant 0 : i32
    %c0_i32_0 = arith.constant 0 : i32
    return %arg0, %c0_i32 : i32, i32
  }
  func.func @transform_1(%arg0: i32) -> i32 {
    %c0_i32 = arith.constant 0 : i32
    %c0_i32_0 = arith.constant 0 : i32
    return %c0_i32 : i32
  }
  func.func @transform_2(%arg0: i32) -> i32 {
    %c0_i32 = arith.constant 0 : i32
    %c0_i32_0 = arith.constant 0 : i32
    return %c0_i32 : i32
  }
}

</mosaic_0001>

<llo_original>
// kernel: tpu_custom_call.1
$region0: #{tpu_custom_call.1}
  #allocation0 [shape = 'u32[]', space=smem, size = 0x4, offset = 0x4, fixed_abs, tag = 'smem constant byte address 0x4 - core index']
  #allocation1 [shape = 'u32[144,128]{1,0:T(1,128)}', space=vmem, size = 0x12000, scoped, tag = 'internal scratch']
  #allocation2 [shape = 'f32[1]{0:T(128)}', space=smem, size = 0x200, scoped, tag = 'scratch operand']
  %s0 = inlined_call_operand.hbm [shape: f32[600,128], index: 0, kind: input, shape index: {}]
  %s1 = inlined_call_operand.hbm [shape: f32[1], index: 1, kind: output, shape index: {0}]
  %s2 = inlined_call_operand.hbm [shape: f32[1], index: 2, kind: output, shape index: {1}]
  %3 = xla_tuple %s1, %s2
  %s4 = sld [smem:[#allocation0]]
  $region57: #{tpu_custom_call.1} parent=0
    _
  %s6 = ssub.s32 1, %s4
  %s7 = scalar_select 0, %s6, %s4
  $region1: #{tpu_custom_call.1} parent=0
    #allocation3 [shape = 'u8[524288]{0}', space=vmem, size = 0x80000, scoped, tag = 'input window, operand 0']
    #allocation4 [shape = 's32[2]{0}', space=sflag, size = 0x8, scoped, tag = 'scoped memory for tpu_custom_call.1']
    #allocation5 [shape = 's32[2]{0}', space=sflag, size = 0x8, scoped, tag = 'scoped memory for tpu_custom_call.1']
    #allocation6 [shape = 'u8[512]{0}', space=smem, size = 0x200, scoped, tag = 'output window, operand 0, single buffered']
    #allocation7 [shape = 'u8[512]{0}', space=smem, size = 0x200, scoped, tag = 'output window, operand 1, single buffered']
    #allocation8 [shape = 's32[1]{0}', space=sflag, size = 0x4, scoped, tag = 'scoped memory for tpu_custom_call.1']
    %8 = vsyncpa [#allocation4], 0
    %s9 = scalar_lea.sflag [#allocation4], 1
    %10 = vsyncpa %s9, 0
    %11 = vsyncpa [#allocation5], 0
    %12 = vsyncpa [#allocation8], 0
    loop: start=0, step=1, limit=4
    $region2: #{tpu_custom_call.1} parent=1 // loop_pre_header
      _
    $region3: #{tpu_custom_call.1} parent=1 // loop_header
      %s14 = sphi 0, %s18
      %p15 = scmp.ge.s32.totalorder %s14, 4
      %s24 = sphi 0, %s26
      %s27 = sphi 0, %s24
      %s28 = sphi 0, %s27
      %s44 = sphi 0, %s28
      %s48 = sphi 0, %s48
      %s50 = sphi 0, %s48
      %s51 = sphi 0, %s50
      %s65 = sphi 0, %s51
      %s69 = sphi 0, %s69
      %s71 = sphi 0, %s69
      %s72 = sphi 0, %s71
      %s86 = sphi 0, %s72
    $region4: #{tpu_custom_call.1} parent=1 // loop_header_branch
      %17 = sbr.rel (%p15) target = $region8
    $region5: #{tpu_custom_call.1} parent=1 // loop_body
      %s19 = ssub.s32 %s14, 1
      %s20 = ssub.s32 %s14, 2
      %s21 = sadd.s32 %s14, 1
      %s22 = ssub.s32 %s14, %s21
      %p23 = scmp.eq.s32.totalorder %s22, 0
      %s25 = sadd.s32 %s24, 1
      %s26 = scalar_select %p23, %s24, %s25
      %p29 = pneg %p23
      %p30 = scmp.eq.s32.totalorder %s14, 1
      %p31 = por %p29, %p30
      %p32 = scmp.ne.s32.totalorder %s24, %s27
      %p33 = scmp.eq.s32.totalorder %s14, 0
      %p34 = por %p32, %p33
      %p35 = scmp.ne.s32.totalorder %s24, %s27
      %p36 = scmp.eq.s32.totalorder %s19, 1
      %p37 = por %p35, %p36
      %p38 = scmp.ne.s32.totalorder %s27, %s28
      %p39 = scmp.eq.s32.totalorder %s19, 0
      %p40 = por %p38, %p39
      %p41 = scmp.ne.s32.totalorder %s27, %s28
      %p42 = scmp.eq.s32.totalorder %s20, 1
      %p43 = por %p41, %p42
      %p45 = scmp.ne.s32.totalorder %s28, %s44
      %p46 = scmp.eq.s32.totalorder %s20, 0
      %p47 = por %p45, %p46
      %s49 = sadd.s32 %s48, 1
      %p52 = scmp.eq.s32.totalorder %s14, 1
      %p53 = scmp.ne.s32.totalorder %s48, %s50
      %p54 = scmp.eq.s32.totalorder %s14, 0
      %p55 = por %p53, %p54
      %p56 = scmp.ne.s32.totalorder %s48, %s50
      %p57 = scmp.eq.s32.totalorder %s19, 1
      %p58 = por %p56, %p57
      %p59 = scmp.ne.s32.totalorder %s50, %s51
      %p60 = scmp.eq.s32.totalorder %s19, 0
      %p61 = por %p59, %p60
      %p62 = scmp.ne.s32.totalorder %s50, %s51
      %p63 = scmp.eq.s32.totalorder %s20, 1
      %p64 = por %p62, %p63
      %p66 = scmp.ne.s32.totalorder %s51, %s65
      %p67 = scmp.eq.s32.totalorder %s20, 0
      %p68 = por %p66, %p67
      %s70 = sadd.s32 %s69, 1
      %p73 = scmp.eq.s32.totalorder %s14, 1
      %p74 = scmp.ne.s32.totalorder %s69, %s71
      %p75 = scmp.eq.s32.totalorder %s14, 0
      %p76 = por %p74, %p75
      %p77 = scmp.ne.s32.totalorder %s69, %s71
      %p78 = scmp.eq.s32.totalorder %s19, 1
      %p79 = por %p77, %p78
      %p80 = scmp.ne.s32.totalorder %s71, %s72
      %p81 = scmp.eq.s32.totalorder %s19, 0
      %p82 = por %p80, %p81
      %p83 = scmp.ne.s32.totalorder %s71, %s72
      %p84 = scmp.eq.s32.totalorder %s20, 1
      %p85 = por %p83, %p84
      %p87 = scmp.ne.s32.totalorder %s72, %s86
      %p88 = scmp.eq.s32.totalorder %s20, 0
      %p89 = por %p87, %p88
      %p90 = scmp.le.s32.totalorder 1, %s14
      %p91 = scmp.lt.s32.totalorder %s14, 3
      %p92 = pnand %p90, %p91
      %p93 = pneg %p92
      // Predicated region
      $region9: #{tpu_custom_call.1} parent=5 // pred_check
        _
      $region10: #{tpu_custom_call.1} parent=5 // pred_check_branch
        %95 = sbr.rel (%p92) target = $region12
      $region11: #{tpu_custom_call.1} parent=5 // pred_region
        %s96 = ssub.s32 %s14, 1
      $region12: #{tpu_custom_call.1} parent=5 // pred_fallthru
        _
      %p97 = scmp.lt.s32.totalorder %s14, 2
      // Predicated region
      $region13: #{tpu_custom_call.1} parent=5 // pred_check
        %p98 = pneg %p97
      $region14: #{tpu_custom_call.1} parent=5 // pred_check_branch
        %100 = sbr.rel (%p98) target = $region16
      $region15: #{tpu_custom_call.1} parent=5 // pred_region
        // Predicated region
        $region17: #{tpu_custom_call.1} parent=15 // pred_check
          %p101 = pneg %p34
        $region18: #{tpu_custom_call.1} parent=15 // pred_check_branch
          %103 = sbr.rel (%p101) target = $region20
        $region19: #{tpu_custom_call.1} parent=15 // pred_region
          %s104 = sand.u32 %s24, 1
          %s105 = scalar_lea.sflag [#allocation4], %s104
          %s106 = sand.u32 %s24, 1
          %s107 = smul.addr %s106, 512
          %s108 = scalar_lea.vmem [#allocation3], %s107
          %s109 = smul.u32 64, %s14
          %s110 = ssub.s32 75, %s109
          %p111 = scmp.lt.s32.totalorder %s110, 64
          %s112 = scalar_select %p111, %s110, 64
          %s113 = smul.u32 128, %s112
          %s115 = ssub.s32 8192, %s113
          %116 = vsyncadd %s105, %s115
          %p117 = scmp.ne.s32.totalorder 0, %s113
          %s118 = smul.addr %s109, 128
          %s119 = scalar_lea.hbm %s0, %s118
          %s120 = smul.u32 8, %s112
          %s121 = sshll.u32 %s108, 4
          %s122 = int_to_ptr.vmem [resolvable:$true] %s121
          %s123 = sshll.u32 %s120, 4
          %127 = dma.hbm_to_vmem [thread:$0]  (%p117), %s119, %s123, %s122, %s105, 128, 128, 8
        $region20: #{tpu_custom_call.1} parent=15 // pred_fallthru
          _
      $region16: #{tpu_custom_call.1} parent=5 // pred_fallthru
        _
      %p128 = scmp.le.s32.totalorder 1, %s14
      %p129 = scmp.lt.s32.totalorder %s14, 3
      %p130 = pnand %p128, %p129
      %p131 = pneg %p130
      // Predicated region
      $region21: #{tpu_custom_call.1} parent=5 // pred_check
        _
      $region22: #{tpu_custom_call.1} parent=5 // pred_check_branch
        %133 = sbr.rel (%p130) target = $region24
      $region23: #{tpu_custom_call.1} parent=5 // pred_region
        %s134 = ssub.s32 %s14, 1
        %s135 = sand.u32 %s27, 1
        %s136 = scalar_lea.sflag [#allocation4], %s135
        %s137 = sand.u32 %s27, 1
        %s138 = smul.addr %s137, 512
        %s139 = scalar_lea.vmem [#allocation3], %s138
        // Predicated region
        $region25: #{tpu_custom_call.1} parent=23 // pred_check
          %p140 = pneg %p40
        $region26: #{tpu_custom_call.1} parent=23 // pred_check_branch
          %142 = sbr.rel (%p140) target = $region28
        $region27: #{tpu_custom_call.1} parent=23 // pred_region
          %143 = dma.done %s136, 8192
        $region28: #{tpu_custom_call.1} parent=23 // pred_fallthru
          _
        %s144 = sand.u32 %s27, 1
        %s145 = scalar_lea.sflag [#allocation4], %s144
        %s146 = sand.u32 %s27, 1
        %s147 = smul.addr %s146, 512
        %s148 = scalar_lea.vmem [#allocation3], %s147
        %p149 = pneg %p40
        %p150 = pneg %p37
        %p151 = pneg %p61
        %p152 = pneg %p58
        %p153 = pneg %p82
        %p154 = pneg %p79
        %s155 = smul.u32 64, %s19
        %s156 = ssub.s32 75, %s155
        %p157 = scmp.lt.s32.totalorder %s156, 64
        %s158 = scalar_select %p157, %s156, 64
        %s159 = smul.u32 128, %s158
        %p160 = scmp.eq.s32.totalorder %s19, 0
        // Predicated region
        $region29: #{tpu_custom_call.1} parent=23 // pred_check
          %p161 = pneg %p160
        $region30: #{tpu_custom_call.1} parent=23 // pred_check_branch
          %163 = sbr.rel (%p161) target = $region32
        $region31: #{tpu_custom_call.1} parent=23 // pred_region
          %s164 = scalar_lea.smem [#allocation2], 0
          %165 = sst [smem:[%s164]] 0.0
        $region32: #{tpu_custom_call.1} parent=23 // pred_fallthru
          _
        %v166 = vld [vmem:[%s139] sm:$0xff]
        %v167 = vld [vmem:[%s139 + $0x8] sm:$0xff]
        %v168 = vld [vmem:[%s139 + $0x10] sm:$0xff]
        %v169 = vld [vmem:[%s139 + $0x18] sm:$0xff]
        %v170 = vld [vmem:[%s139 + $0x20] sm:$0xff]
        %v171 = vld [vmem:[%s139 + $0x28] sm:$0xff]
        %v172 = vld [vmem:[%s139 + $0x30] sm:$0xff]
        %v173 = vld [vmem:[%s139 + $0x38] sm:$0xff]
        %v174 = vld [vmem:[%s139 + $0x40] sm:$0xff]
        %v175 = vld [vmem:[%s139 + $0x48] sm:$0xff]
        %v176 = vld [vmem:[%s139 + $0x50] sm:$0xff]
        %v177 = vld [vmem:[%s139 + $0x58] sm:$0xff]
        %v178 = vld [vmem:[%s139 + $0x60] sm:$0xff]
        %v179 = vld [vmem:[%s139 + $0x68] sm:$0xff]
        %v180 = vld [vmem:[%s139 + $0x70] sm:$0xff]
        %v181 = vld [vmem:[%s139 + $0x78] sm:$0xff]
        %v182 = vld [vmem:[%s139 + $0x80] sm:$0xff]
        %v183 = vld [vmem:[%s139 + $0x88] sm:$0xff]
        %v184 = vld [vmem:[%s139 + $0x90] sm:$0xff]
        %v185 = vld [vmem:[%s139 + $0x98] sm:$0xff]
        %v186 = vld [vmem:[%s139 + $0xa0] sm:$0xff]
        %v187 = vld [vmem:[%s139 + $0xa8] sm:$0xff]
        %v188 = vld [vmem:[%s139 + $0xb0] sm:$0xff]
        %v189 = vld [vmem:[%s139 + $0xb8] sm:$0xff]
        %v190 = vld [vmem:[%s139 + $0xc0] sm:$0xff]
        %v191 = vld [vmem:[%s139 + $0xc8] sm:$0xff]
        %v192 = vld [vmem:[%s139 + $0xd0] sm:$0xff]
        %v193 = vld [vmem:[%s139 + $0xd8] sm:$0xff]
        %v194 = vld [vmem:[%s139 + $0xe0] sm:$0xff]
        %v195 = vld [vmem:[%s139 + $0xe8] sm:$0xff]
        %v196 = vld [vmem:[%s139 + $0xf0] sm:$0xff]
        %v197 = vld [vmem:[%s139 + $0xf8] sm:$0xff]
        %v198 = vld [vmem:[%s139 + $0x100] sm:$0xff]
        %v199 = vld [vmem:[%s139 + $0x108] sm:$0xff]
        %v200 = vld [vmem:[%s139 + $0x110] sm:$0xff]
        %v201 = vld [vmem:[%s139 + $0x118] sm:$0xff]
        %v202 = vld [vmem:[%s139 + $0x120] sm:$0xff]
        %v203 = vld [vmem:[%s139 + $0x128] sm:$0xff]
        %v204 = vld [vmem:[%s139 + $0x130] sm:$0xff]
        %v205 = vld [vmem:[%s139 + $0x138] sm:$0xff]
        %v206 = vld [vmem:[%s139 + $0x140] sm:$0xff]
        %v207 = vld [vmem:[%s139 + $0x148] sm:$0xff]
        %v208 = vld [vmem:[%s139 + $0x150] sm:$0xff]
        %v209 = vld [vmem:[%s139 + $0x158] sm:$0xff]
        %v210 = vld [vmem:[%s139 + $0x160] sm:$0xff]
        %v211 = vld [vmem:[%s139 + $0x168] sm:$0xff]
        %v212 = vld [vmem:[%s139 + $0x170] sm:$0xff]
        %v213 = vld [vmem:[%s139 + $0x178] sm:$0xff]
        %v214 = vld [vmem:[%s139 + $0x180] sm:$0xff]
        %v215 = vld [vmem:[%s139 + $0x188] sm:$0xff]
        %v216 = vld [vmem:[%s139 + $0x190] sm:$0xff]
        %v217 = vld [vmem:[%s139 + $0x198] sm:$0xff]
        %v218 = vld [vmem:[%s139 + $0x1a0] sm:$0xff]
        %v219 = vld [vmem:[%s139 + $0x1a8] sm:$0xff]
        %v220 = vld [vmem:[%s139 + $0x1b0] sm:$0xff]
        %v221 = vld [vmem:[%s139 + $0x1b8] sm:$0xff]
        %v222 = vld [vmem:[%s139 + $0x1c0] sm:$0xff]
        %v223 = vld [vmem:[%s139 + $0x1c8] sm:$0xff]
        %v224 = vld [vmem:[%s139 + $0x1d0] sm:$0xff]
        %v225 = vld [vmem:[%s139 + $0x1d8] sm:$0xff]
        %v226 = vld [vmem:[%s139 + $0x1e0] sm:$0xff]
        %v227 = vld [vmem:[%s139 + $0x1e8] sm:$0xff]
        %v228 = vld [vmem:[%s139 + $0x1f0] sm:$0xff]
        %v229 = vld [vmem:[%s139 + $0x1f8] sm:$0xff]
        %s230 = smul.u32 %s19, 512
        %v231 = vlaneseq
        %v232 = vshrl.u32 %v231, 7
        %v233 = vadd.s32 %v232, 8
        %v234 = vadd.s32 %v232, 16
        %v235 = vadd.s32 %v232, 24
        %v236 = vadd.s32 %v232, 32
        %v237 = vadd.s32 %v232, 40
        %v238 = vadd.s32 %v232, 48
        %v239 = vadd.s32 %v232, 56
        %v240 = vadd.s32 %v232, 64
        %v241 = vadd.s32 %v232, 72
        %v242 = vadd.s32 %v232, 80
        %v243 = vadd.s32 %v232, 88
        %v244 = vadd.s32 %v232, 96
        %v245 = vadd.s32 %v232, 104
        %v246 = vadd.s32 %v232, 112
        %v247 = vadd.s32 %v232, 120
        %v248 = vadd.s32 %v232, 128
        %v249 = vadd.s32 %v232, 136
        %v250 = vadd.s32 %v232, 144
        %v251 = vadd.s32 %v232, 152
        %v252 = vadd.s32 %v232, 160
        %v253 = vadd.s32 %v232, 168
        %v254 = vadd.s32 %v232, 176
        %v255 = vadd.s32 %v232, 184
        %v256 = vadd.s32 %v232, 192
        %v257 = vadd.s32 %v232, 200
        %v258 = vadd.s32 %v232, 208
        %v259 = vadd.s32 %v232, 216
        %v260 = vadd.s32 %v232, 224
        %v261 = vadd.s32 %v232, 232
        %v262 = vadd.s32 %v232, 240
        %v263 = vadd.s32 %v232, 248
        %v264 = vadd.s32 %v232, 256
        %v265 = vadd.s32 %v232, 264
        %v266 = vadd.s32 %v232, 272
        %v267 = vadd.s32 %v232, 280
        %v268 = vadd.s32 %v232, 288
        %v269 = vadd.s32 %v232, 296
        %v270 = vadd.s32 %v232, 304
        %v271 = vadd.s32 %v232, 312
        %v272 = vadd.s32 %v232, 320
        %v273 = vadd.s32 %v232, 328
        %v274 = vadd.s32 %v232, 336
        %v275 = vadd.s32 %v232, 344
        %v276 = vadd.s32 %v232, 352
        %v277 = vadd.s32 %v232, 360
        %v278 = vadd.s32 %v232, 368
        %v279 = vadd.s32 %v232, 376
        %v280 = vadd.s32 %v232, 384
        %v281 = vadd.s32 %v232, 392
        %v282 = vadd.s32 %v232, 400
        %v283 = vadd.s32 %v232, 408
        %v284 = vadd.s32 %v232, 416
        %v285 = vadd.s32 %v232, 424
        %v286 = vadd.s32 %v232, 432
        %v287 = vadd.s32 %v232, 440
        %v288 = vadd.s32 %v232, 448
        %v289 = vadd.s32 %v232, 456
        %v290 = vadd.s32 %v232, 464
        %v291 = vadd.s32 %v232, 472
        %v292 = vadd.s32 %v232, 480
        %v293 = vadd.s32 %v232, 488
        %v294 = vadd.s32 %v232, 496
        %v295 = vadd.s32 %v232, 504
        %v296 = vstv %s230
        %v297 = vadd.s32 %v296, %v232
        %v298 = vadd.s32 %v296, %v233
        %v299 = vadd.s32 %v296, %v234
        %v300 = vadd.s32 %v296, %v235
        %v301 = vadd.s32 %v296, %v236
        %v302 = vadd.s32 %v296, %v237
        %v303 = vadd.s32 %v296, %v238
        %v304 = vadd.s32 %v296, %v239
        %v305 = vadd.s32 %v296, %v240
        %v306 = vadd.s32 %v296, %v241
        %v307 = vadd.s32 %v296, %v242
        %v308 = vadd.s32 %v296, %v243
        %v309 = vadd.s32 %v296, %v244
        %v310 = vadd.s32 %v296, %v245
        %v311 = vadd.s32 %v296, %v246
        %v312 = vadd.s32 %v296, %v247
        %v313 = vadd.s32 %v296, %v248
        %v314 = vadd.s32 %v296, %v249
        %v315 = vadd.s32 %v296, %v250
        %v316 = vadd.s32 %v296, %v251
        %v317 = vadd.s32 %v296, %v252
        %v318 = vadd.s32 %v296, %v253
        %v319 = vadd.s32 %v296, %v254
        %v320 = vadd.s32 %v296, %v255
        %v321 = vadd.s32 %v296, %v256
        %v322 = vadd.s32 %v296, %v257
        %v323 = vadd.s32 %v296, %v258
        %v324 = vadd.s32 %v296, %v259
        %v325 = vadd.s32 %v296, %v260
        %v326 = vadd.s32 %v296, %v261
        %v327 = vadd.s32 %v296, %v262
        %v328 = vadd.s32 %v296, %v263
        %v329 = vadd.s32 %v296, %v264
        %v330 = vadd.s32 %v296, %v265
        %v331 = vadd.s32 %v296, %v266
        %v332 = vadd.s32 %v296, %v267
        %v333 = vadd.s32 %v296, %v268
        %v334 = vadd.s32 %v296, %v269
        %v335 = vadd.s32 %v296, %v270
        %v336 = vadd.s32 %v296, %v271
        %v337 = vadd.s32 %v296, %v272
        %v338 = vadd.s32 %v296, %v273
        %v339 = vadd.s32 %v296, %v274
        %v340 = vadd.s32 %v296, %v275
        %v341 = vadd.s32 %v296, %v276
        %v342 = vadd.s32 %v296, %v277
        %v343 = vadd.s32 %v296, %v278
        %v344 = vadd.s32 %v296, %v279
        %v345 = vadd.s32 %v296, %v280
        %v346 = vadd.s32 %v296, %v281
        %v347 = vadd.s32 %v296, %v282
        %v348 = vadd.s32 %v296, %v283
        %v349 = vadd.s32 %v296, %v284
        %v350 = vadd.s32 %v296, %v285
        %v351 = vadd.s32 %v296, %v286
        %v352 = vadd.s32 %v296, %v287
        %v353 = vadd.s32 %v296, %v288
        %v354 = vadd.s32 %v296, %v289
        %v355 = vadd.s32 %v296, %v290
        %v356 = vadd.s32 %v296, %v291
        %v357 = vadd.s32 %v296, %v292
        %v358 = vadd.s32 %v296, %v293
        %v359 = vadd.s32 %v296, %v294
        %v360 = vadd.s32 %v296, %v295
        %vm361 = vcmp.lt.s32.totalorder %v297, 600
        %vm362 = vcmp.lt.s32.totalorder %v298, 600
        %vm363 = vcmp.lt.s32.totalorder %v299, 600
        %vm364 = vcmp.lt.s32.totalorder %v300, 600
        %vm365 = vcmp.lt.s32.totalorder %v301, 600
        %vm366 = vcmp.lt.s32.totalorder %v302, 600
        %vm367 = vcmp.lt.s32.totalorder %v303, 600
        %vm368 = vcmp.lt.s32.totalorder %v304, 600
        %vm369 = vcmp.lt.s32.totalorder %v305, 600
        %vm370 = vcmp.lt.s32.totalorder %v306, 600
        %vm371 = vcmp.lt.s32.totalorder %v307, 600
        %vm372 = vcmp.lt.s32.totalorder %v308, 600
        %vm373 = vcmp.lt.s32.totalorder %v309, 600
        %vm374 = vcmp.lt.s32.totalorder %v310, 600
        %vm375 = vcmp.lt.s32.totalorder %v311, 600
        %vm376 = vcmp.lt.s32.totalorder %v312, 600
        %vm377 = vcmp.lt.s32.totalorder %v313, 600
        %vm378 = vcmp.lt.s32.totalorder %v314, 600
        %vm379 = vcmp.lt.s32.totalorder %v315, 600
        %vm380 = vcmp.lt.s32.totalorder %v316, 600
        %vm381 = vcmp.lt.s32.totalorder %v317, 600
        %vm382 = vcmp.lt.s32.totalorder %v318, 600
        %vm383 = vcmp.lt.s32.totalorder %v319, 600
        %vm384 = vcmp.lt.s32.totalorder %v320, 600
        %vm385 = vcmp.lt.s32.totalorder %v321, 600
        %vm386 = vcmp.lt.s32.totalorder %v322, 600
        %vm387 = vcmp.lt.s32.totalorder %v323, 600
        %vm388 = vcmp.lt.s32.totalorder %v324, 600
        %vm389 = vcmp.lt.s32.totalorder %v325, 600
        %vm390 = vcmp.lt.s32.totalorder %v326, 600
        %vm391 = vcmp.lt.s32.totalorder %v327, 600
        %vm392 = vcmp.lt.s32.totalorder %v328, 600
        %vm393 = vcmp.lt.s32.totalorder %v329, 600
        %vm394 = vcmp.lt.s32.totalorder %v330, 600
        %vm395 = vcmp.lt.s32.totalorder %v331, 600
        %vm396 = vcmp.lt.s32.totalorder %v332, 600
        %vm397 = vcmp.lt.s32.totalorder %v333, 600
        %vm398 = vcmp.lt.s32.totalorder %v334, 600
        %vm399 = vcmp.lt.s32.totalorder %v335, 600
        %vm400 = vcmp.lt.s32.totalorder %v336, 600
        %vm401 = vcmp.lt.s32.totalorder %v337, 600
        %vm402 = vcmp.lt.s32.totalorder %v338, 600
        %vm403 = vcmp.lt.s32.totalorder %v339, 600
        %vm404 = vcmp.lt.s32.totalorder %v340, 600
        %vm405 = vcmp.lt.s32.totalorder %v341, 600
        %vm406 = vcmp.lt.s32.totalorder %v342, 600
        %vm407 = vcmp.lt.s32.totalorder %v343, 600
        %vm408 = vcmp.lt.s32.totalorder %v344, 600
        %vm409 = vcmp.lt.s32.totalorder %v345, 600
        %vm410 = vcmp.lt.s32.totalorder %v346, 600
        %vm411 = vcmp.lt.s32.totalorder %v347, 600
        %vm412 = vcmp.lt.s32.totalorder %v348, 600
        %vm413 = vcmp.lt.s32.totalorder %v349, 600
        %vm414 = vcmp.lt.s32.totalorder %v350, 600
        %vm415 = vcmp.lt.s32.totalorder %v351, 600
        %vm416 = vcmp.lt.s32.totalorder %v352, 600
        %vm417 = vcmp.lt.s32.totalorder %v353, 600
        %vm418 = vcmp.lt.s32.totalorder %v354, 600
        %vm419 = vcmp.lt.s32.totalorder %v355, 600
        %vm420 = vcmp.lt.s32.totalorder %v356, 600
        %vm421 = vcmp.lt.s32.totalorder %v357, 600
        %vm422 = vcmp.lt.s32.totalorder %v358, 600
        %vm423 = vcmp.lt.s32.totalorder %v359, 600
        %vm424 = vcmp.lt.s32.totalorder %v360, 600
        %v425 = vsel %vm361, %v166, 0.0
        %v426 = vsel %vm362, %v167, 0.0
        %v427 = vsel %vm363, %v168, 0.0
        %v428 = vsel %vm364, %v169, 0.0
        %v429 = vsel %vm365, %v170, 0.0
        %v430 = vsel %vm366, %v171, 0.0
        %v431 = vsel %vm367, %v172, 0.0
        %v432 = vsel %vm368, %v173, 0.0
        %v433 = vsel %vm369, %v174, 0.0
        %v434 = vsel %vm370, %v175, 0.0
        %v435 = vsel %vm371, %v176, 0.0
        %v436 = vsel %vm372, %v177, 0.0
        %v437 = vsel %vm373, %v178, 0.0
        %v438 = vsel %vm374, %v179, 0.0
        %v439 = vsel %vm375, %v180, 0.0
        %v440 = vsel %vm376, %v181, 0.0
        %v441 = vsel %vm377, %v182, 0.0
        %v442 = vsel %vm378, %v183, 0.0
        %v443 = vsel %vm379, %v184, 0.0
        %v444 = vsel %vm380, %v185, 0.0
        %v445 = vsel %vm381, %v186, 0.0
        %v446 = vsel %vm382, %v187, 0.0
        %v447 = vsel %vm383, %v188, 0.0
        %v448 = vsel %vm384, %v189, 0.0
        %v449 = vsel %vm385, %v190, 0.0
        %v450 = vsel %vm386, %v191, 0.0
        %v451 = vsel %vm387, %v192, 0.0
        %v452 = vsel %vm388, %v193, 0.0
        %v453 = vsel %vm389, %v194, 0.0
        %v454 = vsel %vm390, %v195, 0.0
        %v455 = vsel %vm391, %v196, 0.0
        %v456 = vsel %vm392, %v197, 0.0
        %v457 = vsel %vm393, %v198, 0.0
        %v458 = vsel %vm394, %v199, 0.0
        %v459 = vsel %vm395, %v200, 0.0
        %v460 = vsel %vm396, %v201, 0.0
        %v461 = vsel %vm397, %v202, 0.0
        %v462 = vsel %vm398, %v203, 0.0
        %v463 = vsel %vm399, %v204, 0.0
        %v464 = vsel %vm400, %v205, 0.0
        %v465 = vsel %vm401, %v206, 0.0
        %v466 = vsel %vm402, %v207, 0.0
        %v467 = vsel %vm403, %v208, 0.0
        %v468 = vsel %vm404, %v209, 0.0
        %v469 = vsel %vm405, %v210, 0.0
        %v470 = vsel %vm406, %v211, 0.0
        %v471 = vsel %vm407, %v212, 0.0
        %v472 = vsel %vm408, %v213, 0.0
        %v473 = vsel %vm409, %v214, 0.0
        %v474 = vsel %vm410, %v215, 0.0
        %v475 = vsel %vm411, %v216, 0.0
        %v476 = vsel %vm412, %v217, 0.0
        %v477 = vsel %vm413, %v218, 0.0
        %v478 = vsel %vm414, %v219, 0.0
        %v479 = vsel %vm415, %v220, 0.0
        %v480 = vsel %vm416, %v221, 0.0
        %v481 = vsel %vm417, %v222, 0.0
        %v482 = vsel %vm418, %v223, 0.0
        %v483 = vsel %vm419, %v224, 0.0
        %v484 = vsel %vm420, %v225, 0.0
        %v485 = vsel %vm421, %v226, 0.0
        %v486 = vsel %vm422, %v227, 0.0
        %v487 = vsel %vm423, %v228, 0.0
        %v488 = vsel %vm424, %v229, 0.0
        %v489 = vand.u32 2147483647, %v425
        %v490 = vand.u32 2147483647, %v426
        %v491 = vand.u32 2147483647, %v427
        %v492 = vand.u32 2147483647, %v428
        %v493 = vand.u32 2147483647, %v429
        %v494 = vand.u32 2147483647, %v430
        %v495 = vand.u32 2147483647, %v431
        %v496 = vand.u32 2147483647, %v432
        %v497 = vand.u32 2147483647, %v433
        %v498 = vand.u32 2147483647, %v434
        %v499 = vand.u32 2147483647, %v435
        %v500 = vand.u32 2147483647, %v436
        %v501 = vand.u32 2147483647, %v437
        %v502 = vand.u32 2147483647, %v438
        %v503 = vand.u32 2147483647, %v439
        %v504 = vand.u32 2147483647, %v440
        %v505 = vand.u32 2147483647, %v441
        %v506 = vand.u32 2147483647, %v442
        %v507 = vand.u32 2147483647, %v443
        %v508 = vand.u32 2147483647, %v444
        %v509 = vand.u32 2147483647, %v445
        %v510 = vand.u32 2147483647, %v446
        %v511 = vand.u32 2147483647, %v447
        %v512 = vand.u32 2147483647, %v448
        %v513 = vand.u32 2147483647, %v449
        %v514 = vand.u32 2147483647, %v450
        %v515 = vand.u32 2147483647, %v451
        %v516 = vand.u32 2147483647, %v452
        %v517 = vand.u32 2147483647, %v453
        %v518 = vand.u32 2147483647, %v454
        %v519 = vand.u32 2147483647, %v455
        %v520 = vand.u32 2147483647, %v456
        %v521 = vand.u32 2147483647, %v457
        %v522 = vand.u32 2147483647, %v458
        %v523 = vand.u32 2147483647, %v459
        %v524 = vand.u32 2147483647, %v460
        %v525 = vand.u32 2147483647, %v461
        %v526 = vand.u32 2147483647, %v462
        %v527 = vand.u32 2147483647, %v463
        %v528 = vand.u32 2147483647, %v464
        %v529 = vand.u32 2147483647, %v465
        %v530 = vand.u32 2147483647, %v466
        %v531 = vand.u32 2147483647, %v467
        %v532 = vand.u32 2147483647, %v468
        %v533 = vand.u32 2147483647, %v469
        %v534 = vand.u32 2147483647, %v470
        %v535 = vand.u32 2147483647, %v471
        %v536 = vand.u32 2147483647, %v472
        %v537 = vand.u32 2147483647, %v473
        %v538 = vand.u32 2147483647, %v474
        %v539 = vand.u32 2147483647, %v475
        %v540 = vand.u32 2147483647, %v476
        %v541 = vand.u32 2147483647, %v477
        %v542 = vand.u32 2147483647, %v478
        %v543 = vand.u32 2147483647, %v479
        %v544 = vand.u32 2147483647, %v480
        %v545 = vand.u32 2147483647, %v481
        %v546 = vand.u32 2147483647, %v482
        %v547 = vand.u32 2147483647, %v483
        %v548 = vand.u32 2147483647, %v484
        %v549 = vand.u32 2147483647, %v485
        %v550 = vand.u32 2147483647, %v486
        %v551 = vand.u32 2147483647, %v487
        %v552 = vand.u32 2147483647, %v488
        %v553 = vmax.f32 %v489, %v493
        %v554 = vmax.f32 %v490, %v494
        %v555 = vmax.f32 %v491, %v495
        %v556 = vmax.f32 %v492, %v496
        %v557 = vmax.f32 %v553, %v497
        %v558 = vmax.f32 %v554, %v498
        %v559 = vmax.f32 %v555, %v499
        %v560 = vmax.f32 %v556, %v500
        %v561 = vmax.f32 %v557, %v501
        %v562 = vmax.f32 %v558, %v502
        %v563 = vmax.f32 %v559, %v503
        %v564 = vmax.f32 %v560, %v504
        %v565 = vmax.f32 %v561, %v505
        %v566 = vmax.f32 %v562, %v506
        %v567 = vmax.f32 %v563, %v507
        %v568 = vmax.f32 %v564, %v508
        %v569 = vmax.f32 %v565, %v509
        %v570 = vmax.f32 %v566, %v510
        %v571 = vmax.f32 %v567, %v511
        %v572 = vmax.f32 %v568, %v512
        %v573 = vmax.f32 %v569, %v513
        %v574 = vmax.f32 %v570, %v514
        %v575 = vmax.f32 %v571, %v515
        %v576 = vmax.f32 %v572, %v516
        %v577 = vmax.f32 %v573, %v517
        %v578 = vmax.f32 %v574, %v518
        %v579 = vmax.f32 %v575, %v519
        %v580 = vmax.f32 %v576, %v520
        %v581 = vmax.f32 %v577, %v521
        %v582 = vmax.f32 %v578, %v522
        %v583 = vmax.f32 %v579, %v523
        %v584 = vmax.f32 %v580, %v524
        %v585 = vmax.f32 %v581, %v525
        %v586 = vmax.f32 %v582, %v526
        %v587 = vmax.f32 %v583, %v527
        %v588 = vmax.f32 %v584, %v528
        %v589 = vmax.f32 %v585, %v529
        %v590 = vmax.f32 %v586, %v530
        %v591 = vmax.f32 %v587, %v531
        %v592 = vmax.f32 %v588, %v532
        %v593 = vmax.f32 %v589, %v533
        %v594 = vmax.f32 %v590, %v534
        %v595 = vmax.f32 %v591, %v535
        %v596 = vmax.f32 %v592, %v536
        %v597 = vmax.f32 %v593, %v537
        %v598 = vmax.f32 %v594, %v538
        %v599 = vmax.f32 %v595, %v539
        %v600 = vmax.f32 %v596, %v540
        %v601 = vmax.f32 %v597, %v541
        %v602 = vmax.f32 %v598, %v542
        %v603 = vmax.f32 %v599, %v543
        %v604 = vmax.f32 %v600, %v544
        %v605 = vmax.f32 %v601, %v545
        %v606 = vmax.f32 %v602, %v546
        %v607 = vmax.f32 %v603, %v547
        %v608 = vmax.f32 %v604, %v548
        %v609 = vmax.f32 %v605, %v549
        %v610 = vmax.f32 %v606, %v550
        %v611 = vmax.f32 %v607, %v551
        %v612 = vmax.f32 %v608, %v552
        %v613 = vmax.f32 %v609, %v610
        %v614 = vmax.f32 %v611, %v612
        %v615 = vmax.f32 %v613, %v614
        %616 = vmax.xlane.f32.xlu0 %v615
        %v617 = vpop.xlane.xlu0 %616
        %v618 = vrot.slane %v617, 4
        %v619 = vmax.f32 %v617, %v618
        %v620 = vrot.slane %v619, 2
        %v621 = vmax.f32 %v619, %v620
        %v622 = vrot.slane %v621, 1
        %v623 = vmax.f32 %v621, %v622
        %s624 = vtos %v623
        %s625 = sld [smem:[#allocation2]]
        %s626 = smax.f32 %s625, %s624
        %s627 = scalar_lea.smem [#allocation2], 0
        %628 = sst [smem:[%s627]] %s626
        %p629 = scmp.eq.s32.totalorder %s19, 1
        // Predicated region
        $region33: #{tpu_custom_call.1} parent=23 // pred_check
          %p630 = pneg %p629
        $region34: #{tpu_custom_call.1} parent=23 // pred_check_branch
          %632 = sbr.rel (%p630) target = $region36
        $region35: #{tpu_custom_call.1} parent=23 // pred_region
          %s633 = sld [smem:[#allocation2]]
          %s634 = smax.f32 %s633, 1e-08
          %v635 = vrcp.pop 127.0
          %s636 = vtos %v635
          %s637 = smul.f32 %s634, %s636
          %s638 = scalar_lea.smem [#allocation6], 0
          %639 = sst [smem:[%s638]] %s637
          %v640 = vstv %s637
          %v641 = vrcp.pop %v640
          %s642 = vtos %v641
          %s643 = scalar_lea.smem [#allocation7], 0
          %644 = sst [smem:[%s643]] %s642
        $region36: #{tpu_custom_call.1} parent=23 // pred_fallthru
          _
        // Predicated region
        $region37: #{tpu_custom_call.1} parent=23 // pred_check
          %p645 = pneg %p58
        $region38: #{tpu_custom_call.1} parent=23 // pred_check_branch
          %647 = sbr.rel (%p645) target = $region40
        $region39: #{tpu_custom_call.1} parent=23 // pred_region
          %s649 = ssub.s32 16, 16
          %650 = vsyncadd [#allocation5], %s649
          %653 = dma.smem_to_hbm [#allocation6], 16, %s1, [#allocation5]
        $region40: #{tpu_custom_call.1} parent=23 // pred_fallthru
          _
        // Predicated region
        $region41: #{tpu_custom_call.1} parent=23 // pred_check
          %p654 = pneg %p79
        $region42: #{tpu_custom_call.1} parent=23 // pred_check_branch
          %656 = sbr.rel (%p654) target = $region44
        $region43: #{tpu_custom_call.1} parent=23 // pred_region
          %s658 = ssub.s32 16, 16
          %659 = vsyncadd [#allocation8], %s658
          %662 = dma.smem_to_hbm [#allocation7], 16, %s2, [#allocation8]
        $region44: #{tpu_custom_call.1} parent=23 // pred_fallthru
          _
        // Predicated region
        $region45: #{tpu_custom_call.1} parent=23 // pred_check
          %p663 = pneg %p58
        $region46: #{tpu_custom_call.1} parent=23 // pred_check_branch
          %665 = sbr.rel (%p663) target = $region48
        $region47: #{tpu_custom_call.1} parent=23 // pred_region
          %666 = dma.done [#allocation5], 16
        $region48: #{tpu_custom_call.1} parent=23 // pred_fallthru
          _
        // Predicated region
        $region49: #{tpu_custom_call.1} parent=23 // pred_check
          %p667 = pneg %p79
        $region50: #{tpu_custom_call.1} parent=23 // pred_check_branch
          %669 = sbr.rel (%p667) target = $region52
        $region51: #{tpu_custom_call.1} parent=23 // pred_region
          %670 = dma.done [#allocation8], 16
        $region52: #{tpu_custom_call.1} parent=23 // pred_fallthru
          _
        %671 = sfence
      $region24: #{tpu_custom_call.1} parent=5 // pred_fallthru
        _
      %p672 = scmp.le.s32.totalorder 2, %s14
      // Predicated region
      $region53: #{tpu_custom_call.1} parent=5 // pred_check
        %p673 = pneg %p672
      $region54: #{tpu_custom_call.1} parent=5 // pred_check_branch
        %675 = sbr.rel (%p673) target = $region56
      $region55: #{tpu_custom_call.1} parent=5 // pred_region
        %s676 = ssub.s32 %s14, 2
      $region56: #{tpu_custom_call.1} parent=5 // pred_fallthru
        _
    $region6: #{tpu_custom_call.1} parent=1 // loop_footer
      %s18 = sadd.s32 1, %s14
    $region7: #{tpu_custom_call.1} parent=1 // loop_footer_branch
      %13 = sbr.rel target = $region3
    $region8: #{tpu_custom_call.1} parent=1 // loop_exit
      _
    %677 = vsyncpa [#allocation4], 1
    %s678 = scalar_lea.sflag [#allocation4], 1
    %679 = vsyncpa %s678, 1
    %680 = vsyncpa [#allocation5], 1
    %s681 = scalar_lea.sflag [#allocation5], 1
    %682 = vsyncpa %s681, 1
    %683 = vsyncpa [#allocation8], 1

</llo_original>
